<compile_context>
chip_gen: v7x
topology: tpu7x:2x2x1
jax: 0.10.0
libtpu: 0.0.40
codegen_flags: <defaults>
</compile_context>

<pallas_src>
import math

import jax
import jax.numpy as jnp
from jax.experimental import pallas as pl
from jax.experimental.pallas import tpu as pltpu


def _drop_path_kernel(x_ref, s_ref, o_ref):
    """One grid step: (TB, TILE) slab of x times the per-sample (TB, 1) scale."""
    o_ref[...] = x_ref[...] * s_ref[...]


def _choose_tiles(B, F, itemsize):
    """Byte-budgeted tile sizes for a purely HBM-bound elementwise op."""
    LANE = 128

    # Batch tile: full batch when small, otherwise an 8-aligned cap so big-batch
    # activations don't blow VMEM (block bytes scale linearly with the batch tile).
    TB = B if B <= 512 else 512

    # Feature tile: target ~2 MiB per block (mem-bound roofline saturates around
    # 1-4 MiB blocks), capped so 2 arrays (in+out) x 2 pipeline buffers x block
    # stays <= ~12 MiB — safe under the scoped-VMEM defaults of every generation
    # (v5e 16 MiB, v6e/v7x 32 MiB) and under v7x's 64 MiB physical VMEM.
    target_block_bytes = 2 << 20
    vmem_block_budget = 12 << 20
    per_row_bytes = max(1, TB * itemsize)
    tile = target_block_bytes // per_row_bytes
    tile = min(tile, vmem_block_budget // (4 * per_row_bytes))
    tile = max(LANE, (tile // LANE) * LANE)

    f_pad = pl.cdiv(F, LANE) * LANE
    tile = min(tile, f_pad)

    # If the whole (padded) feature axis fits in one block and the batch axis
    # doesn't already provide multiple steps, split the feature axis in two so the
    # "parallel" grid can shard across v7x's 2 TensorCores.
    if B <= 512 and tile >= f_pad and f_pad > LANE:
        tile = max(LANE, pl.cdiv(f_pad, 2 * LANE) * LANE)

    return TB, tile


def drop_path_forward(x, drop_prob=0.0, *, training=False, key=None):
    """Pallas-TPU DropPath. Matches torch drop_path(x, drop_prob, training) semantics."""
    if drop_prob == 0.0 or not training:
        return x  # identity, exactly like the PyTorch short-circuit
    if not (0.0 <= drop_prob < 1.0):
        raise ValueError("drop_prob must be in [0, 1)")
    if key is None:
        key = jax.random.PRNGKey(0)

    keep_prob = 1.0 - drop_prob
    B = x.shape[0]
    F = math.prod(x.shape[1:])
    x2 = x.reshape(B, F)  # flatten non-batch dims -> lane-dense 2D layout

    # Per-sample keep/scale computed ONCE, wrapper-side (PyTorch recipe:
    # random_tensor = floor(keep_prob + U); output = x / keep_prob * random_tensor).
    # Cast to x.dtype so narrow dtypes stay packed through the in-kernel multiply.
    u = jax.random.uniform(key, (B, 1), dtype=jnp.float32)
    keep = jnp.floor(keep_prob + u)                 # 0.0 or 1.0 per sample
    scale = (keep * (1.0 / keep_prob)).astype(x.dtype)   # (B, 1)

    TB, TILE = _choose_tiles(B, F, jnp.dtype(x.dtype).itemsize)
    grid = (pl.cdiv(B, TB), pl.cdiv(F, TILE))

    out = pl.pallas_call(
        _drop_path_kernel,
        out_shape=jax.ShapeDtypeStruct((B, F), x.dtype),
        grid=grid,
        in_specs=[
            pl.BlockSpec((TB, TILE), lambda b, f: (b, f)),   # x slab
            pl.BlockSpec((TB, 1), lambda b, f: (b, 0)),      # per-sample scale
        ],
        out_specs=pl.BlockSpec((TB, TILE), lambda b, f: (b, f)),
        compiler_params=pltpu.CompilerParams(
            # Independent tiles -> both axes parallel (megacore / 2-TC sharding on v7x).
            dimension_semantics=("parallel", "parallel"),
            vmem_limit_bytes=32 * 1024 * 1024,
        ),
    )(x2, scale)

    return out.reshape(x.shape)


if __name__ == "__main__":
    key = jax.random.PRNGKey(0)
    kx, kmask = jax.random.split(key)

    # (B, C, H, W) = (2, 4, 16, 16) -> flattened feature dim F = 1024.
    x = jax.random.normal(kx, (2, 4, 16, 16), jnp.float32)
    drop_prob = 0.35
    keep_prob = 1.0 - drop_prob

    # --- eval mode: identity (PyTorch short-circuit) ---
    y_eval = drop_path_forward(x, drop_prob, training=False)
    assert bool((y_eval == x).all()), "eval-mode DropPath must be identity"

    # --- training mode: per-sample stochastic depth via the Pallas kernel ---
    y = drop_path_forward(x, drop_prob, training=True, key=kmask)
    y = jax.block_until_ready(y)
    assert y.shape == x.shape and y.dtype == x.dtype

    # Structural check: every sample is either fully dropped (all zeros) or kept and
    # scaled by exactly 1/keep_prob, consistently across ALL feature tiles.
    xf = x.reshape(x.shape[0], -1)
    yf = y.reshape(y.shape[0], -1)
    for b in range(x.shape[0]):
        dropped = bool(jnp.max(jnp.abs(yf[b])) == 0.0)
        kept = bool(jnp.allclose(yf[b], xf[b] / keep_prob, atol=1e-5, rtol=1e-5))
        assert dropped or kept, f"sample {b}: output is not a valid DropPath result"

    # Determinism: same key -> same per-sample mask.
    y2 = jax.block_until_ready(drop_path_forward(x, drop_prob, training=True, key=kmask))
    assert bool(jnp.allclose(y, y2)), "same key must reproduce the same mask"

    # bf16 path stays packed through the multiply (scale is cast to x.dtype).
    xb = x.astype(jnp.bfloat16)
    yb = jax.block_until_ready(drop_path_forward(xb, drop_prob, training=True, key=kmask))
    assert yb.shape == xb.shape and yb.dtype == jnp.bfloat16

    print("KERNEL_OK")
</pallas_src>

<mosaic_0001>
module attributes {stable_mosaic.version = 11 : i64} {
  func.func @_drop_path_kernel(%arg0: i32, %arg1: i32, %arg2: memref<2x512xf32, #tpu.memory_space<vmem>>, %arg3: memref<2x1xf32, #tpu.memory_space<vmem>>, %arg4: memref<2x512xf32, #tpu.memory_space<vmem>>) attributes {dimension_semantics = [#tpu.dimension_semantics<parallel>, #tpu.dimension_semantics<parallel>], iteration_bounds = array<i64: 1, 2>, scalar_prefetch = 0 : i64, scratch_operands = 0 : i64, tpu.core_type = #tpu.core_type<tc>, window_params = [{transform_indices = @transform_0, window_bounds = array<i64: 2, 512>}, {transform_indices = @transform_1, window_bounds = array<i64: 2, 1>}, {transform_indices = @transform_2, window_bounds = array<i64: 2, 512>}]} {
    %c0 = arith.constant 0 : index
    %c0_0 = arith.constant 0 : index
    %0 = vector.load %arg2[%c0, %c0_0] : memref<2x512xf32, #tpu.memory_space<vmem>>, vector<2x512xf32>
    %c0_1 = arith.constant 0 : index
    %c0_2 = arith.constant 0 : index
    %1 = vector.load %arg3[%c0_1, %c0_2] : memref<2x1xf32, #tpu.memory_space<vmem>>, vector<2x1xf32>
    %2 = vector.broadcast %1 : vector<2x1xf32> to vector<2x512xf32>
    %3 = arith.mulf %0, %2 : vector<2x512xf32>
    %c0_3 = arith.constant 0 : index
    %c0_4 = arith.constant 0 : index
    %4 = vector.load %arg4[%c0_3, %c0_4] : memref<2x512xf32, #tpu.memory_space<vmem>>, vector<2x512xf32>
    tpu.vector_store %arg4[%c0_3, %c0_4], %3 {strides = array<i32>} : memref<2x512xf32, #tpu.memory_space<vmem>>, vector<2x512xf32>,
    return
  }
  func.func @transform_0(%arg0: i32, %arg1: i32) -> (i32, i32) {
    %c0_i32 = arith.constant 0 : i32
    return %arg0, %arg1 : i32, i32
  }
  func.func @transform_1(%arg0: i32, %arg1: i32) -> (i32, i32) {
    %c0_i32 = arith.constant 0 : i32
    %c0_i32_0 = arith.constant 0 : i32
    return %arg0, %c0_i32 : i32, i32
  }
  func.func @transform_2(%arg0: i32, %arg1: i32) -> (i32, i32) {
    %c0_i32 = arith.constant 0 : i32
    return %arg0, %arg1 : i32, i32
  }
}

</mosaic_0001>

<llo_original>
// kernel: tpu_custom_call.1
$region0: #{tpu_custom_call.1}
  #allocation0 [shape = 'u32[]', space=smem, size = 0x4, offset = 0x4, fixed_abs, tag = 'smem constant byte address 0x4 - core index']
  #allocation1 [shape = 'u32[144,128]{1,0:T(1,128)}', space=vmem, size = 0x12000, scoped, tag = 'internal scratch']
  %s0 = inlined_call_operand.hbm [shape: f32[2,1024], index: 0, kind: input, shape index: {}]
  %s1 = inlined_call_operand.vmem [shape: f32[2,1], index: 1, kind: input, shape index: {}]
  %s2 = inlined_call_operand.hbm [shape: f32[2,1024], index: 2, kind: output, shape index: {}]
  %s3 = sld [smem:[#allocation0]]
  $region45: #{tpu_custom_call.1} parent=0
    _
  %s5 = ssub.s32 1, %s3
  %s6 = scalar_select 0, %s5, %s3
  $region1: #{tpu_custom_call.1} parent=0
    #allocation2 [shape = 'u8[8192]{0}', space=vmem, size = 0x2000, scoped, tag = 'input window, operand 0']
    #allocation3 [shape = 's32[2]{0}', space=sflag, size = 0x8, scoped, tag = 'scoped memory for tpu_custom_call.1']
    #allocation4 [shape = 's32[2]{0}', space=sflag, size = 0x8, scoped, tag = 'scoped memory for tpu_custom_call.1']
    #allocation5 [shape = 'u8[8192]{0}', space=vmem, size = 0x2000, scoped, tag = 'output window, operand 0']
    %7 = vsyncpa [#allocation3], 0
    %s8 = scalar_lea.sflag [#allocation3], 1
    %9 = vsyncpa %s8, 0
    %10 = vsyncpa [#allocation4], 0
    %s11 = scalar_lea.sflag [#allocation4], 1
    %12 = vsyncpa %s11, 0
    loop: start=0, step=1, limit=4
    $region2: #{tpu_custom_call.1} parent=1 // loop_pre_header
      _
    $region3: #{tpu_custom_call.1} parent=1 // loop_header
      %s14 = sphi 0, %s18
      %p15 = scmp.ge.s32.totalorder %s14, 4
      %s21 = sphi 0, %s33
      %s22 = sphi 0, %s29
      %s23 = sphi 0, %s21
      %s24 = sphi 0, %s22
      %s25 = sphi 0, %s23
      %s26 = sphi 0, %s24
      %s38 = sphi 0, %s40
      %s41 = sphi 0, %s38
      %s42 = sphi 0, %s41
      %s58 = sphi 0, %s42
      %s64 = sphi 0, %s66
      %s67 = sphi 0, %s64
      %s68 = sphi 0, %s67
      %s84 = sphi 0, %s68
      %s92 = sphi 0, %s94
      %s95 = sphi 0, %s92
      %s96 = sphi 0, %s95
      %s112 = sphi 0, %s96
    $region4: #{tpu_custom_call.1} parent=1 // loop_header_branch
      %17 = sbr.rel (%p15) target = $region8
    $region5: #{tpu_custom_call.1} parent=1 // loop_body
      %s19 = ssub.s32 %s14, 1
      %s20 = ssub.s32 %s14, 2
      %s27 = sadd.s32 1, %s22
      %p28 = scmp.ge.s32.totalorder %s27, 2
      %s29 = scalar_select %p28, 0, %s27
      %s30 = sadd.s32 1, %s21
      %s31 = scalar_select %p28, %s30, %s21
      %p32 = scmp.ge.s32.totalorder %s31, 1
      %s33 = scalar_select %p32, 0, %s31
      %s34 = ssub.s32 %s21, %s33
      %s35 = ssub.s32 %s22, %s29
      %s36 = sor.u32 %s34, %s35
      %p37 = scmp.eq.s32.totalorder %s36, 0
      %s39 = sadd.s32 %s38, 1
      %s40 = scalar_select %p37, %s38, %s39
      %p43 = pneg %p37
      %p44 = scmp.eq.s32.totalorder %s14, 1
      %p45 = por %p43, %p44
      %p46 = scmp.ne.s32.totalorder %s38, %s41
      %p47 = scmp.eq.s32.totalorder %s14, 0
      %p48 = por %p46, %p47
      %p49 = scmp.ne.s32.totalorder %s38, %s41
      %p50 = scmp.eq.s32.totalorder %s19, 1
      %p51 = por %p49, %p50
      %p52 = scmp.ne.s32.totalorder %s41, %s42
      %p53 = scmp.eq.s32.totalorder %s19, 0
      %p54 = por %p52, %p53
      %p55 = scmp.ne.s32.totalorder %s41, %s42
      %p56 = scmp.eq.s32.totalorder %s20, 1
      %p57 = por %p55, %p56
      %p59 = scmp.ne.s32.totalorder %s42, %s58
      %p60 = scmp.eq.s32.totalorder %s20, 0
      %p61 = por %p59, %p60
      %s62 = ssub.s32 %s21, %s33
      %p63 = scmp.eq.s32.totalorder %s62, 0
      %s65 = sadd.s32 %s64, 1
      %s66 = scalar_select %p63, %s64, %s65
      %p69 = pneg %p63
      %p70 = scmp.eq.s32.totalorder %s14, 1
      %p71 = por %p69, %p70
      %p72 = scmp.ne.s32.totalorder %s64, %s67
      %p73 = scmp.eq.s32.totalorder %s14, 0
      %p74 = por %p72, %p73
      %p75 = scmp.ne.s32.totalorder %s64, %s67
      %p76 = scmp.eq.s32.totalorder %s19, 1
      %p77 = por %p75, %p76
      %p78 = scmp.ne.s32.totalorder %s67, %s68
      %p79 = scmp.eq.s32.totalorder %s19, 0
      %p80 = por %p78, %p79
      %p81 = scmp.ne.s32.totalorder %s67, %s68
      %p82 = scmp.eq.s32.totalorder %s20, 1
      %p83 = por %p81, %p82
      %p85 = scmp.ne.s32.totalorder %s68, %s84
      %p86 = scmp.eq.s32.totalorder %s20, 0
      %p87 = por %p85, %p86
      %s88 = ssub.s32 %s21, %s33
      %s89 = ssub.s32 %s22, %s29
      %s90 = sor.u32 %s88, %s89
      %p91 = scmp.eq.s32.totalorder %s90, 0
      %s93 = sadd.s32 %s92, 1
      %s94 = scalar_select %p91, %s92, %s93
      %p97 = pneg %p91
      %p98 = scmp.eq.s32.totalorder %s14, 1
      %p99 = por %p97, %p98
      %p100 = scmp.ne.s32.totalorder %s92, %s95
      %p101 = scmp.eq.s32.totalorder %s14, 0
      %p102 = por %p100, %p101
      %p103 = scmp.ne.s32.totalorder %s92, %s95
      %p104 = scmp.eq.s32.totalorder %s19, 1
      %p105 = por %p103, %p104
      %p106 = scmp.ne.s32.totalorder %s95, %s96
      %p107 = scmp.eq.s32.totalorder %s19, 0
      %p108 = por %p106, %p107
      %p109 = scmp.ne.s32.totalorder %s95, %s96
      %p110 = scmp.eq.s32.totalorder %s20, 1
      %p111 = por %p109, %p110
      %p113 = scmp.ne.s32.totalorder %s96, %s112
      %p114 = scmp.eq.s32.totalorder %s20, 0
      %p115 = por %p113, %p114
      %p116 = scmp.le.s32.totalorder 1, %s14
      %p117 = scmp.lt.s32.totalorder %s14, 3
      %p118 = pnand %p116, %p117
      %p119 = pneg %p118
      // Predicated region
      $region9: #{tpu_custom_call.1} parent=5 // pred_check
        _
      $region10: #{tpu_custom_call.1} parent=5 // pred_check_branch
        %121 = sbr.rel (%p118) target = $region12
      $region11: #{tpu_custom_call.1} parent=5 // pred_region
        %s122 = ssub.s32 %s14, 1
        // Predicated region
        $region13: #{tpu_custom_call.1} parent=11 // pred_check
          %p123 = pneg %p80
        $region14: #{tpu_custom_call.1} parent=11 // pred_check_branch
          %125 = sbr.rel (%p123) target = $region16
        $region15: #{tpu_custom_call.1} parent=11 // pred_region
          %p126 = scmp.lt.s32.totalorder %s23, 0
          %s127 = scalar_select %p126, %s23, 0
          %s128 = smul.addr %s127, 2
          %s129 = scalar_lea.vmem %s1, %s128
        $region16: #{tpu_custom_call.1} parent=11 // pred_fallthru
          _
      $region12: #{tpu_custom_call.1} parent=5 // pred_fallthru
        _
      %p130 = scmp.lt.s32.totalorder %s14, 2
      // Predicated region
      $region17: #{tpu_custom_call.1} parent=5 // pred_check
        %p131 = pneg %p130
      $region18: #{tpu_custom_call.1} parent=5 // pred_check_branch
        %133 = sbr.rel (%p131) target = $region20
      $region19: #{tpu_custom_call.1} parent=5 // pred_region
        // Predicated region
        $region21: #{tpu_custom_call.1} parent=19 // pred_check
          %p134 = pneg %p48
        $region22: #{tpu_custom_call.1} parent=19 // pred_check_branch
          %136 = sbr.rel (%p134) target = $region24
        $region23: #{tpu_custom_call.1} parent=19 // pred_region
          %s137 = sand.u32 %s38, 1
          %s138 = scalar_lea.sflag [#allocation3], %s137
          %s139 = sand.u32 %s38, 1
          %s140 = smul.addr %s139, 8
          %s141 = scalar_lea.vmem [#allocation2], %s140
          %s142 = smul.u32 4, %s22
          %s144 = ssub.s32 128, 128
          %145 = vsyncadd %s138, %s144
          %s146 = smul.addr %s21, 8
          %s147 = sadd.s32 %s142, %s146
          %s148 = smul.addr %s147, 32
          %s149 = scalar_lea.hbm %s0, %s148
          %s151 = sshll.u32 %s141, 4
          %s152 = int_to_ptr.vmem [resolvable:$true] %s151
          %154 = dma.hbm_to_vmem [thread:$0]  %s149, 128, %s152, %s138
        $region24: #{tpu_custom_call.1} parent=19 // pred_fallthru
          _
      $region20: #{tpu_custom_call.1} parent=5 // pred_fallthru
        _
      %p155 = scmp.le.s32.totalorder 1, %s14
      %p156 = scmp.lt.s32.totalorder %s14, 3
      %p157 = pnand %p155, %p156
      %p158 = pneg %p157
      // Predicated region
      $region25: #{tpu_custom_call.1} parent=5 // pred_check
        _
      $region26: #{tpu_custom_call.1} parent=5 // pred_check_branch
        %160 = sbr.rel (%p157) target = $region28
      $region27: #{tpu_custom_call.1} parent=5 // pred_region
        %s161 = ssub.s32 %s14, 1
        %s162 = sand.u32 %s41, 1
        %s163 = scalar_lea.sflag [#allocation3], %s162
        %s164 = sand.u32 %s41, 1
        %s165 = smul.addr %s164, 8
        %s166 = scalar_lea.vmem [#allocation2], %s165
        // Predicated region
        $region29: #{tpu_custom_call.1} parent=27 // pred_check
          %p167 = pneg %p54
        $region30: #{tpu_custom_call.1} parent=27 // pred_check_branch
          %169 = sbr.rel (%p167) target = $region32
        $region31: #{tpu_custom_call.1} parent=27 // pred_region
          %170 = dma.done %s163, 128
        $region32: #{tpu_custom_call.1} parent=27 // pred_fallthru
          _
        %s171 = sand.u32 %s41, 1
        %s172 = scalar_lea.sflag [#allocation3], %s171
        %s173 = sand.u32 %s41, 1
        %s174 = smul.addr %s173, 8
        %s175 = scalar_lea.vmem [#allocation2], %s174
        %p176 = pneg %p54
        %p177 = pneg %p51
        %p178 = scmp.lt.s32.totalorder %s23, 0
        %s179 = scalar_select %p178, %s23, 0
        %s180 = smul.addr %s179, 2
        %s181 = scalar_lea.vmem %s1, %s180
        %p182 = pneg %p80
        %p183 = pneg %p77
        %p184 = pneg %p108
        %p185 = pneg %p105
        %s186 = sand.u32 %s95, 1
        %s187 = scalar_lea.sflag [#allocation4], %s186
        %s188 = sand.u32 %s95, 1
        %s189 = smul.addr %s188, 8
        %s190 = scalar_lea.vmem [#allocation5], %s189
        %s191 = smul.u32 4, %s24
        %p192 = scmp.lt.s32.totalorder %s23, 0
        %s193 = scalar_select %p192, %s23, 0
        %s194 = smul.addr %s193, 2
        %s195 = scalar_lea.vmem %s1, %s194
        %s196 = smul.u32 4, %s24
        %v197 = vld [vmem:[%s166] sm:$0xff]
        %v198 = vld [vmem:[%s195] sm:$0x3]
        %200 = vset.pattern.permute.xlu0 0
        %201 = vperm.xlu0 %200, %v198
        %v202 = vpop.permute.xlu0 %201
        %v204 = vunpack.c.l.s4 269488144
        %v205 = vunpack.c.0.s8 %v204
        %v206 = vlaneseq
        %v207 = vshrl.u32 %v206, 7
        %v208 = vsub.s32 %v205, %v207
        %v209 = vrot.slane %v202, %v208
        %v211 = vmul.f32 %v197, %v209
        %212 = vst [vmem:[%s190] sm:$0xff] %v211
        %s213 = sand.u32 %s95, 1
        %s214 = scalar_lea.sflag [#allocation4], %s213
        %s215 = sand.u32 %s95, 1
        %s216 = smul.addr %s215, 8
        %s217 = scalar_lea.vmem [#allocation5], %s216
        // Predicated region
        $region33: #{tpu_custom_call.1} parent=27 // pred_check
          %p218 = pneg %p105
        $region34: #{tpu_custom_call.1} parent=27 // pred_check_branch
          %220 = sbr.rel (%p218) target = $region36
        $region35: #{tpu_custom_call.1} parent=27 // pred_region
          %s221 = smul.u32 4, %s24
          %s223 = ssub.s32 128, 128
          %224 = vsyncadd %s214, %s223
          %s225 = smul.addr %s23, 8
          %s226 = sadd.s32 %s221, %s225
          %s227 = smul.addr %s226, 32
          %s228 = scalar_lea.hbm %s2, %s227
          %s230 = sshll.u32 %s217, 4
          %s231 = int_to_ptr.vmem [resolvable:$true] %s230
          %233 = dma.vmem_to_hbm [thread:$0]  %s231, 128, %s228, %s214
        $region36: #{tpu_custom_call.1} parent=27 // pred_fallthru
          _
      $region28: #{tpu_custom_call.1} parent=5 // pred_fallthru
        _
      %p234 = scmp.le.s32.totalorder 2, %s14
      // Predicated region
      $region37: #{tpu_custom_call.1} parent=5 // pred_check
        %p235 = pneg %p234
      $region38: #{tpu_custom_call.1} parent=5 // pred_check_branch
        %237 = sbr.rel (%p235) target = $region40
      $region39: #{tpu_custom_call.1} parent=5 // pred_region
        %s238 = ssub.s32 %s14, 2
        // Predicated region
        $region41: #{tpu_custom_call.1} parent=39 // pred_check
          %p239 = pneg %p111
        $region42: #{tpu_custom_call.1} parent=39 // pred_check_branch
          %241 = sbr.rel (%p239) target = $region44
        $region43: #{tpu_custom_call.1} parent=39 // pred_region
          %s242 = sand.u32 %s96, 1
          %s243 = scalar_lea.sflag [#allocation4], %s242
          %s244 = sand.u32 %s96, 1
          %s245 = smul.addr %s244, 8
          %s246 = scalar_lea.vmem [#allocation5], %s245
          %247 = dma.done %s243, 128
        $region44: #{tpu_custom_call.1} parent=39 // pred_fallthru
          _
      $region40: #{tpu_custom_call.1} parent=5 // pred_fallthru
        _
    $region6: #{tpu_custom_call.1} parent=1 // loop_footer
      %s18 = sadd.s32 1, %s14
    $region7: #{tpu_custom_call.1} parent=1 // loop_footer_branch
      %13 = sbr.rel target = $region3
    $region8: #{tpu_custom_call.1} parent=1 // loop_exit
      _
    %248 = vsyncpa [#allocation3], 1
    %s249 = scalar_lea.sflag [#allocation3], 1
    %250 = vsyncpa %s249, 1
    %251 = vsyncpa [#allocation4], 1
    %s252 = scalar_lea.sflag [#allocation4], 1
    %253 = vsyncpa %s252, 1

</llo_original>
